<compile_context>
chip_gen: v7x
topology: tpu7x:2x2x1
jax: 0.10.0
libtpu: 0.0.40
codegen_flags: <defaults>
</compile_context>

<pallas_src>
import jax
import jax.numpy as jnp
from jax.experimental import pallas as pl
from jax.experimental.pallas import tpu as pltpu


def _mlp_dis_kernel(x_ref, w1_ref, b1_ref, w2_ref, b2_ref, o_ref):
    # x_ref : (tb, 320) f32     w1_ref: (320, 50) bf16
    # b1_ref: (1, 50)  f32 VMEM w2_ref: (1, 50)  bf16 VMEM
    # b2_ref: (1,)     f32 SMEM o_ref : (1, tb)  f32  (lane-dense: batch along lanes)

    # Cast the f32 tile to bf16 in-kernel (VPU, hidden under the x DMA) so the MXU
    # runs a single-pass bf16 matmul on all generations (no f32 emulation on v5e).
    xb = x_ref[...].astype(jnp.bfloat16)
    h = jnp.dot(xb, w1_ref[...], preferred_element_type=jnp.float32)   # (tb, 50) f32
    h = jnp.maximum(h + b1_ref[...], 0.0)                              # ReLU
    # TODO(synk): F.dropout(training=self.training) is identity at inference; training-mode
    # dropout (pltpu.prng_random_bits masking) is intentionally not applied here.

    # Second layer: y[b] = sum_j h[b, j] * w2[j] + b2, computed as
    # (1, 50) x (tb, 50)^T on the MXU (bf16 operands, f32 accumulation) so the result
    # lands directly as a lane-dense (1, tb) row — no (tb, 1) column, no masked stores.
    hb = h.astype(jnp.bfloat16)
    y = jax.lax.dot_general(
        w2_ref[...], hb,
        dimension_numbers=(((1,), (1,)), ((), ())),
        preferred_element_type=jnp.float32,
    ) + b2_ref[0]                                                      # (1, tb) f32
    o_ref[...] = jax.nn.sigmoid(y).astype(o_ref.dtype)


def net1_dis_forward(x, params, *, tb=4096):
    """x: (B, 320) float32 -> (B, 1) float32 in [0, 1]."""
    w1, b1, w2, b2 = params
    B, D = x.shape
    H = w1.shape[1]  # 50
    assert D == w1.shape[0] == 320

    # Weights: bf16 for MXU operands, f32 for biases.
    w1b = jnp.asarray(w1, jnp.bfloat16)                  # (320, 50)
    b1f = jnp.asarray(b1, jnp.float32).reshape(1, H)     # (1, 50)
    w2b = jnp.asarray(w2, jnp.bfloat16).reshape(1, H)    # (1, 50) row vector
    b2f = jnp.asarray(b2, jnp.float32).reshape(1)        # (1,) scalar -> SMEM

    # ---- tile selection (no wrapper-side pad; ragged tail handled by the grid) ----
    if B <= 256:
        # Single block whose shape equals the full array dims (no (8,128) constraint).
        tb_eff = B
    else:
        # Lane-aligned tile, capped at `tb`, and split so there are >= ~4 grid steps:
        # v7x shards "parallel" grid steps across its two TensorCores, and multiple
        # steps keep the DMA/compute pipeline busy on every generation.
        tb_cap = max(128, (tb // 128) * 128)
        tb_eff = min(tb_cap, ((pl.cdiv(B, 4) + 127) // 128) * 128)
    grid = (pl.cdiv(B, tb_eff),)

    out = pl.pallas_call(
        _mlp_dis_kernel,
        out_shape=jax.ShapeDtypeStruct((1, B), jnp.float32),
        grid_spec=pltpu.PrefetchScalarGridSpec(
            num_scalar_prefetch=0,
            grid=grid,
            in_specs=[
                pl.BlockSpec((tb_eff, D), lambda i: (i, 0)),         # x tile (native f32)
                pl.BlockSpec((D, H), lambda i: (0, 0)),              # w1 (bf16, VMEM-resident)
                pl.BlockSpec((1, H), lambda i: (0, 0)),              # b1
                pl.BlockSpec((1, H), lambda i: (0, 0)),              # w2 row (bf16)
                pl.BlockSpec(memory_space=pltpu.MemorySpace.SMEM),   # b2 scalar
            ],
            out_specs=pl.BlockSpec((1, tb_eff), lambda i: (0, i)),   # lane-dense output
        ),
        compiler_params=pltpu.CompilerParams(
            # Batch axis is fully parallel; with >=2 grid steps v7x shards tiles
            # across both TensorCores.
            dimension_semantics=("parallel",),
            # ~17 MiB peak at tb=4096 (double-buffered f32 x tiles + bf16/f32 temps);
            # 32 MiB is above v5e's 16 MiB scoped default and safe on v6e/v7x.
            vmem_limit_bytes=32 * 1024 * 1024,
        ),
    )(x, w1b, b1f, w2b, b2f)

    return out.reshape(B, 1)


def init_params(key):
    """Deterministic init mimicking PyTorch nn.Linear defaults:
    U(-1/sqrt(fan_in), 1/sqrt(fan_in)) for both weight and bias."""
    k1, k2, k3, k4 = jax.random.split(key, 4)
    bnd1 = 1.0 / jnp.sqrt(320.0)
    bnd2 = 1.0 / jnp.sqrt(50.0)
    # stored as (in, out) so the forward computes x @ W
    w1 = jax.random.uniform(k1, (320, 50), jnp.float32, -bnd1, bnd1)
    b1 = jax.random.uniform(k2, (1, 50), jnp.float32, -bnd1, bnd1)
    w2 = jax.random.uniform(k3, (50, 1), jnp.float32, -bnd2, bnd2)
    b2 = jax.random.uniform(k4, (1, 1), jnp.float32, -bnd2, bnd2)
    return w1, b1, w2, b2


if __name__ == "__main__":
    key = jax.random.PRNGKey(0)
    pkey, xkey = jax.random.split(key)
    params = init_params(pkey)
    w1, b1, w2, b2 = params

    def reference(x):
        # Reference applies the same bf16 rounding (x, w1, h, w2) the kernel uses,
        # with f32 accumulation. Note: differs from the pure-f32 PyTorch model by
        # O(1e-3) relative due to bf16 MXU operands.
        xf = x.astype(jnp.bfloat16)
        w1f = w1.astype(jnp.bfloat16)
        h = jnp.maximum(
            jnp.dot(xf, w1f, preferred_element_type=jnp.float32) + b1, 0.0)
        hb = h.astype(jnp.bfloat16)
        w2f = w2.astype(jnp.bfloat16)
        logits = jnp.dot(hb, w2f, preferred_element_type=jnp.float32) + b2
        return jax.nn.sigmoid(logits)

    # Small batch: single full-array block path.
    B = 16
    x = jax.random.normal(xkey, (B, 320), jnp.float32)
    out = jax.block_until_ready(net1_dis_forward(x, params))
    assert out.shape == (B, 1)
    assert jnp.allclose(out, reference(x), atol=2e-3, rtol=2e-3)
    assert bool(jnp.all((out >= 0.0) & (out <= 1.0)))

    # Larger, unaligned batch: multi-tile path with a partial (masked) tail block.
    B2 = 300
    x2 = jax.random.normal(jax.random.PRNGKey(1), (B2, 320), jnp.float32)
    out2 = jax.block_until_ready(net1_dis_forward(x2, params))
    assert out2.shape == (B2, 1)
    assert jnp.allclose(out2, reference(x2), atol=2e-3, rtol=2e-3)
    assert bool(jnp.all((out2 >= 0.0) & (out2 <= 1.0)))

    print("KERNEL_OK")
</pallas_src>

<mosaic_0001>
module attributes {stable_mosaic.version = 11 : i64} {
  func.func @_mlp_dis_kernel(%arg0: i32, %arg1: memref<16x320xf32, #tpu.memory_space<vmem>>, %arg2: memref<320x50xbf16, #tpu.memory_space<vmem>>, %arg3: memref<1x50xf32, #tpu.memory_space<vmem>>, %arg4: memref<1x50xbf16, #tpu.memory_space<vmem>>, %arg5: memref<1xf32, #tpu.memory_space<smem>>, %arg6: memref<1x16xf32, #tpu.memory_space<vmem>>) attributes {dimension_semantics = [#tpu.dimension_semantics<parallel>], iteration_bounds = array<i64: 1>, scalar_prefetch = 0 : i64, scratch_operands = 0 : i64, tpu.core_type = #tpu.core_type<tc>, window_params = [{transform_indices = @transform_0, window_bounds = array<i64: 16, 320>}, {pipeline_mode = #tpu.pipeline_mode<synchronous>, transform_indices = @transform_1, window_bounds = array<i64: 320, 50>}, {pipeline_mode = #tpu.pipeline_mode<synchronous>, transform_indices = @transform_2, window_bounds = array<i64: 1, 50>}, {pipeline_mode = #tpu.pipeline_mode<synchronous>, transform_indices = @transform_3, window_bounds = array<i64: 1, 50>}, {transform_indices = @transform_4, window_bounds = array<i64: 1>}, {transform_indices = @transform_5, window_bounds = array<i64: 1, 16>}]} {
    %c0 = arith.constant 0 : index
    %c0_0 = arith.constant 0 : index
    %0 = vector.load %arg1[%c0, %c0_0] : memref<16x320xf32, #tpu.memory_space<vmem>>, vector<16x320xf32>
    %1 = arith.truncf %0 : vector<16x320xf32> to vector<16x320xbf16>
    %c0_1 = arith.constant 0 : index
    %c0_2 = arith.constant 0 : index
    %2 = vector.load %arg2[%c0_1, %c0_2] : memref<320x50xbf16, #tpu.memory_space<vmem>>, vector<320x50xbf16>
    %cst = arith.constant dense<0.000000e+00> : vector<16x50xf32>
    %3 = tpu.matmul %1, %2, %cst {dimension_numbers = #tpu.dot_dimension_numbers<[1], [0], [0], [1], [0, 0, 1, 1], [], []>} : vector<16x320xbf16>, vector<320x50xbf16>, vector<16x50xf32> -> vector<16x50xf32>
    %c0_3 = arith.constant 0 : index
    %c0_4 = arith.constant 0 : index
    %4 = vector.load %arg3[%c0_3, %c0_4] : memref<1x50xf32, #tpu.memory_space<vmem>>, vector<1x50xf32>
    %5 = vector.broadcast %4 : vector<1x50xf32> to vector<16x50xf32>
    %6 = arith.addf %3, %5 : vector<16x50xf32>
    %cst_5 = arith.constant 0.000000e+00 : f32
    %7 = vector.broadcast %cst_5 : f32 to vector<16x50xf32>
    %8 = arith.maximumf %6, %7 : vector<16x50xf32>
    %9 = arith.truncf %8 : vector<16x50xf32> to vector<16x50xbf16>
    %c0_6 = arith.constant 0 : index
    %c0_7 = arith.constant 0 : index
    %10 = vector.load %arg4[%c0_6, %c0_7] : memref<1x50xbf16, #tpu.memory_space<vmem>>, vector<1x50xbf16>
    %cst_8 = arith.constant dense<0.000000e+00> : vector<1x16xf32>
    %11 = tpu.matmul %10, %9, %cst_8 {dimension_numbers = #tpu.dot_dimension_numbers<[1], [1], [0], [0], [0, 0, 1, 0], [], []>} : vector<1x50xbf16>, vector<16x50xbf16>, vector<1x16xf32> -> vector<1x16xf32>
    %c0_9 = arith.constant 0 : index
    %12 = memref.load %arg5[%c0_9] : memref<1xf32, #tpu.memory_space<smem>>
    %13 = vector.broadcast %12 : f32 to vector<1x16xf32>
    %14 = arith.addf %11, %13 : vector<1x16xf32>
    %15 = arith.negf %14 : vector<1x16xf32>
    %16 = math.exp %15 : vector<1x16xf32>
    %cst_10 = arith.constant 1.000000e+00 : f32
    %17 = vector.broadcast %cst_10 : f32 to vector<1x16xf32>
    %18 = arith.addf %17, %16 : vector<1x16xf32>
    %19 = arith.divf %17, %18 : vector<1x16xf32>
    %c0_11 = arith.constant 0 : index
    %c0_12 = arith.constant 0 : index
    %20 = vector.load %arg6[%c0_11, %c0_12] : memref<1x16xf32, #tpu.memory_space<vmem>>, vector<1x16xf32>
    tpu.vector_store %arg6[%c0_11, %c0_12], %19 {strides = array<i32>} : memref<1x16xf32, #tpu.memory_space<vmem>>, vector<1x16xf32>,
    return
  }
  func.func @transform_0(%arg0: i32) -> (i32, i32) {
    %c0_i32 = arith.constant 0 : i32
    %c0_i32_0 = arith.constant 0 : i32
    return %arg0, %c0_i32 : i32, i32
  }
  func.func @transform_1(%arg0: i32) -> (i32, i32) {
    %c0_i32 = arith.constant 0 : i32
    %c0_i32_0 = arith.constant 0 : i32
    %c0_i32_1 = arith.constant 0 : i32
    return %c0_i32, %c0_i32_0 : i32, i32
  }
  func.func @transform_2(%arg0: i32) -> (i32, i32) {
    %c0_i32 = arith.constant 0 : i32
    %c0_i32_0 = arith.constant 0 : i32
    %c0_i32_1 = arith.constant 0 : i32
    return %c0_i32, %c0_i32_0 : i32, i32
  }
  func.func @transform_3(%arg0: i32) -> (i32, i32) {
    %c0_i32 = arith.constant 0 : i32
    %c0_i32_0 = arith.constant 0 : i32
    %c0_i32_1 = arith.constant 0 : i32
    return %c0_i32, %c0_i32_0 : i32, i32
  }
  func.func @transform_4(%arg0: i32) -> i32 {
    %c0_i32 = arith.constant 0 : i32
    %c0_i32_0 = arith.constant 0 : i32
    return %c0_i32 : i32
  }
  func.func @transform_5(%arg0: i32) -> (i32, i32) {
    %c0_i32 = arith.constant 0 : i32
    %c0_i32_0 = arith.constant 0 : i32
    return %c0_i32, %arg0 : i32, i32
  }
}

</mosaic_0001>

<llo_original>
// kernel: tpu_custom_call.1
$region0: #{tpu_custom_call.1}
  #allocation0 [shape = 'u32[]', space=smem, size = 0x4, offset = 0x4, fixed_abs, tag = 'smem constant byte address 0x4 - core index']
  #allocation1 [shape = 'u32[144,128]{1,0:T(1,128)}', space=vmem, size = 0x12000, scoped, tag = 'internal scratch']
  #allocation2 [shape = 'f32[1]{0:T(128)S(6)}', space=smem, size = 0x200, scoped, tag = 'scoped memory for tpu_custom_call.1']
  %s0 = inlined_call_operand.vmem [shape: f32[16,320], index: 0, kind: input, shape index: {}]
  %s1 = inlined_call_operand.vmem [shape: bf16[320,50], index: 1, kind: input, shape index: {}]
  %s2 = inlined_call_operand.vmem [shape: f32[1,50], index: 2, kind: input, shape index: {}]
  %s3 = inlined_call_operand.vmem [shape: bf16[1,50], index: 3, kind: input, shape index: {}]
  %s4 = inlined_call_operand.<no memory space> [shape: f32[1], index: 4, kind: input, shape index: {}]
  %s5 = inlined_call_operand.hbm [shape: f32[1,16], index: 5, kind: output, shape index: {}]
  %s6 = sld [smem:[#allocation0]]
  $region30: #{tpu_custom_call.1} parent=0
    _
  %s8 = ssub.s32 1, %s6
  %s9 = scalar_select 0, %s8, %s6
  %10 = sst [smem:[#allocation2]] %s4
  $region1: #{tpu_custom_call.1} parent=0
    #allocation3 [shape = 'u8[512]{0}', space=vmem, size = 0x400, scoped, tag = 'output window, operand 0, single buffered']
    #allocation4 [shape = 's32[1]{0}', space=sflag, size = 0x4, scoped, tag = 'scoped memory for tpu_custom_call.1']
    %11 = vsyncpa [#allocation4], 0
    // Predicated region
    $region2: #{tpu_custom_call.1} parent=1 // pred_check
      _
    $region3: #{tpu_custom_call.1} parent=1 // pred_check_branch
      %13 = sbr.rel (0) target = $region5
    $region4: #{tpu_custom_call.1} parent=1 // pred_region
      _
    $region5: #{tpu_custom_call.1} parent=1 // pred_fallthru
      _
    // Predicated region
    $region6: #{tpu_custom_call.1} parent=1 // pred_check
      _
    $region7: #{tpu_custom_call.1} parent=1 // pred_check_branch
      %15 = sbr.rel (0) target = $region9
    $region8: #{tpu_custom_call.1} parent=1 // pred_region
      _
    $region9: #{tpu_custom_call.1} parent=1 // pred_fallthru
      _
    // Predicated region
    $region10: #{tpu_custom_call.1} parent=1 // pred_check
      _
    $region11: #{tpu_custom_call.1} parent=1 // pred_check_branch
      %17 = sbr.rel (0) target = $region13
    $region12: #{tpu_custom_call.1} parent=1 // pred_region
      _
    $region13: #{tpu_custom_call.1} parent=1 // pred_fallthru
      _
    // Predicated region
    $region14: #{tpu_custom_call.1} parent=1 // pred_check
      _
    $region15: #{tpu_custom_call.1} parent=1 // pred_check_branch
      %19 = sbr.rel (0) target = $region17
    $region16: #{tpu_custom_call.1} parent=1 // pred_region
      _
    $region17: #{tpu_custom_call.1} parent=1 // pred_fallthru
      _
    // Predicated region
    $region18: #{tpu_custom_call.1} parent=1 // pred_check
      _
    $region19: #{tpu_custom_call.1} parent=1 // pred_check_branch
      %21 = sbr.rel (0) target = $region21
    $region20: #{tpu_custom_call.1} parent=1 // pred_region
      _
    $region21: #{tpu_custom_call.1} parent=1 // pred_fallthru
      _
    %v23 = vld [vmem:[%s0] sm:$0xff]
    %v24 = vld [vmem:[%s0 + $0x8] sm:$0xff]
    %v25 = vld [vmem:[%s0 + $0x10] sm:$0xff]
    %v26 = vld [vmem:[%s0 + $0x18] sm:$0xff]
    %v27 = vld [vmem:[%s0 + $0x20] sm:$0xff]
    %v28 = vld [vmem:[%s0 + $0x28] sm:$0xff]
    %v29 = vpack.c.bf16 %v26, %v23
    %v30 = vpack.c.bf16 %v27, %v24
    %v31 = vpack.c.bf16 %v28, %v25
    %v32 = vld [vmem:[%s1] sm:$0xf]
    %v33 = vld [vmem:[%s1 + $0x4] sm:$0xf]
    %v34 = vld [vmem:[%s1 + $0x8] sm:$0xf]
    %v35 = vld [vmem:[%s1 + $0xc] sm:$0xf]
    %v36 = vld [vmem:[%s1 + $0x10] sm:$0xf]
    %v37 = vld [vmem:[%s1 + $0x14] sm:$0xf]
    %v38 = vld [vmem:[%s1 + $0x18] sm:$0xf]
    %v39 = vld [vmem:[%s1 + $0x1c] sm:$0xf]
    %v40 = vld [vmem:[%s1 + $0x20] sm:$0xf]
    %v41 = vld [vmem:[%s1 + $0x24] sm:$0xf]
    %v42 = vld [vmem:[%s1 + $0x28] sm:$0xf]
    %v43 = vld [vmem:[%s1 + $0x2c] sm:$0xf]
    %v44 = vld [vmem:[%s1 + $0x30] sm:$0xf]
    %v45 = vld [vmem:[%s1 + $0x34] sm:$0xf]
    %v46 = vld [vmem:[%s1 + $0x38] sm:$0xf]
    %v47 = vld [vmem:[%s1 + $0x3c] sm:$0xf]
    %v48 = vld [vmem:[%s1 + $0x40] sm:$0xf]
    %v49 = vld [vmem:[%s1 + $0x44] sm:$0xf]
    %v50 = vld [vmem:[%s1 + $0x48] sm:$0xf]
    %v51 = vld [vmem:[%s1 + $0x4c] sm:$0xf]
    %v52 = vld [vmem:[%s1 + $0x50] sm:$0xf]
    %v53 = vld [vmem:[%s1 + $0x54] sm:$0xf]
    %v54 = vld [vmem:[%s1 + $0x58] sm:$0xf]
    %v55 = vld [vmem:[%s1 + $0x5c] sm:$0xf]
    %v56 = vld [vmem:[%s1 + $0x60] sm:$0xf]
    %v57 = vld [vmem:[%s1 + $0x64] sm:$0xf]
    %v58 = vld [vmem:[%s1 + $0x68] sm:$0xf]
    %v59 = vld [vmem:[%s1 + $0x6c] sm:$0xf]
    %v60 = vld [vmem:[%s1 + $0x70] sm:$0xf]
    %v61 = vld [vmem:[%s1 + $0x74] sm:$0xf]
    %v62 = vld [vmem:[%s1 + $0x78] sm:$0xf]
    %v63 = vld [vmem:[%s1 + $0x7c] sm:$0xf]
    %v64 = vld [vmem:[%s1 + $0x80] sm:$0xf]
    %v65 = vld [vmem:[%s1 + $0x84] sm:$0xf]
    %v66 = vld [vmem:[%s1 + $0x88] sm:$0xf]
    %v67 = vld [vmem:[%s1 + $0x8c] sm:$0xf]
    %v68 = vld [vmem:[%s1 + $0x90] sm:$0xf]
    %v69 = vld [vmem:[%s1 + $0x94] sm:$0xf]
    %v70 = vld [vmem:[%s1 + $0x98] sm:$0xf]
    %v71 = vld [vmem:[%s1 + $0x9c] sm:$0xf]
    %v72 = vld [vmem:[%s2] sm:$0x1]
    %v74 = vlaneseq
    %v75 = vshrl.u32 %v74, 7
    %v76 = vsub.s32 0, %v75
    %v77 = vrot.slane %v72, %v76
    %v119 = vunpack.c.l.b16 %v32
    %v120 = vunpack.c.l.b16 %v33
    %v121 = vunpack.c.l.b16 %v34
    %v122 = vunpack.c.l.b16 %v35
    %v123 = vunpack.c.l.b16 %v36
    %v124 = vunpack.c.l.b16 %v37
    %v125 = vunpack.c.l.b16 %v38
    %v126 = vunpack.c.l.b16 %v39
    %v127 = vunpack.c.l.b16 %v40
    %v128 = vunpack.c.l.b16 %v41
    %v129 = vunpack.c.l.b16 %v42
    %v130 = vunpack.c.l.b16 %v43
    %v131 = vunpack.c.l.b16 %v44
    %v132 = vunpack.c.l.b16 %v45
    %v133 = vunpack.c.l.b16 %v46
    %v134 = vunpack.c.l.b16 %v47
    %v135 = vunpack.c.l.b16 %v48
    %v136 = vunpack.c.l.b16 %v49
    %v137 = vunpack.c.l.b16 %v50
    %v138 = vunpack.c.l.b16 %v51
    %v139 = vunpack.c.l.b16 %v52
    %v140 = vunpack.c.l.b16 %v53
    %v141 = vunpack.c.l.b16 %v54
    %v142 = vunpack.c.l.b16 %v55
    %v143 = vunpack.c.l.b16 %v56
    %v144 = vunpack.c.l.b16 %v57
    %v145 = vunpack.c.l.b16 %v58
    %v146 = vunpack.c.l.b16 %v59
    %v147 = vunpack.c.l.b16 %v60
    %v148 = vunpack.c.l.b16 %v61
    %v149 = vunpack.c.l.b16 %v62
    %v150 = vunpack.c.l.b16 %v63
    %v151 = vunpack.c.l.b16 %v64
    %v152 = vunpack.c.l.b16 %v65
    %v153 = vunpack.c.l.b16 %v66
    %v154 = vunpack.c.l.b16 %v67
    %v155 = vunpack.c.l.b16 %v68
    %v156 = vunpack.c.l.b16 %v69
    %v157 = vunpack.c.l.b16 %v70
    %v158 = vunpack.c.l.b16 %v71
    %v159 = vpack.c.b16 %v120, %v119
    %v160 = vpack.c.b16 %v122, %v121
    %v161 = vpack.c.b16 %v124, %v123
    %v162 = vpack.c.b16 %v126, %v125
    %v163 = vpack.c.b16 %v128, %v127
    %v164 = vpack.c.b16 %v130, %v129
    %v165 = vpack.c.b16 %v132, %v131
    %v166 = vpack.c.b16 %v134, %v133
    %v167 = vpack.c.b16 %v136, %v135
    %v168 = vpack.c.b16 %v138, %v137
    %v169 = vpack.c.b16 %v140, %v139
    %v170 = vpack.c.b16 %v142, %v141
    %v171 = vpack.c.b16 %v144, %v143
    %v172 = vpack.c.b16 %v146, %v145
    %v173 = vpack.c.b16 %v148, %v147
    %v174 = vpack.c.b16 %v150, %v149
    %v175 = vpack.c.b16 %v152, %v151
    %v176 = vpack.c.b16 %v154, %v153
    %v177 = vpack.c.b16 %v156, %v155
    %v178 = vpack.c.b16 %v158, %v157
    %vm199 = vcmask 523264
    %v201 = vsel %vm199, %v31, 0
    %203 = vmatprep.subr.bf16.mxu0 0
    %204 = vmatpush1.bf16.msra.mxu0 %v159
    %205 = vmatprep.subr.bf16.mxu0 0
    %206 = vmatpush1.bf16.msra.mxu0 %v160
    %207 = vmatprep.subr.bf16.mxu0 0
    %208 = vmatpush1.bf16.msra.mxu0 %v161
    %209 = vmatprep.subr.bf16.mxu0 0
    %210 = vmatpush1.bf16.msra.mxu0 %v162
    %211 = vmatprep.subr.bf16.mxu0 0
    %212 = vmatpush1.bf16.msra.mxu0 %v163
    %213 = vmatprep.subr.bf16.mxu0 0
    %214 = vmatpush1.bf16.msra.mxu0 %v164
    %215 = vmatprep.subr.bf16.mxu0 0
    %216 = vmatpush1.bf16.msra.mxu0 %v165
    %217 = vmatprep.subr.bf16.mxu0 0
    %218 = vmatpush1.bf16.msra.mxu0 %v166
    %219 = vmatprep.subr.bf16.mxu0 0
    %220 = vmatpush1.bf16.msra.mxu0 %v167
    %221 = vmatprep.subr.bf16.mxu0 0
    %222 = vmatpush1.bf16.msra.mxu0 %v168
    %223 = vmatprep.subr.bf16.mxu0 0
    %224 = vmatpush1.bf16.msra.mxu0 %v169
    %225 = vmatprep.subr.bf16.mxu0 0
    %226 = vmatpush1.bf16.msra.mxu0 %v170
    %227 = vmatprep.subr.bf16.mxu0 0
    %228 = vmatpush1.bf16.msra.mxu0 %v171
    %229 = vmatprep.subr.bf16.mxu0 0
    %230 = vmatpush1.bf16.msra.mxu0 %v172
    %231 = vmatprep.subr.bf16.mxu0 0
    %232 = vmatpush1.bf16.msra.mxu0 %v173
    %233 = vmatprep.subr.bf16.mxu0 0
    %234 = vmatpush1.bf16.msra.mxu0 %v174
    %235 = vmatprep.mubr.bf16.mxu0 %v30
    %236 = vmatmul.mubr.bf16.gmra.mrb[0].mxu0 %v29
    %v237 = vpop.f32.mrb[0].mxu0
    %v238 = vadd.f32 %v77, %v237
    %v239 = vpop.f32.mrb[0].mxu0
    %v240 = vpop.f32.mrb[0].mxu0
    %v241 = vadd.f32 %v77, %v240
    %v242 = vpop.f32.mrb[0].mxu0
    %243 = vdwg.mxu0
    %244 = vmatprep.subr.bf16.mxu0 0
    %245 = vmatpush1.bf16.msra.mxu0 %v175
    %246 = vmatprep.subr.bf16.mxu0 0
    %247 = vmatpush1.bf16.msra.mxu0 %v176
    %248 = vmatprep.subr.bf16.mxu0 0
    %249 = vmatpush1.bf16.msra.mxu0 %v177
    %250 = vmatprep.subr.bf16.mxu0 0
    %251 = vmatpush1.bf16.msra.mxu0 %v178
    %252 = vmatprep.subr.bf16.mxu0 0
    %253 = vmatpush1.bf16.msra.mxu0 0
    %254 = vmatprep.subr.bf16.mxu0 0
    %255 = vmatpush1.bf16.msra.mxu0 0
    %256 = vmatprep.subr.bf16.mxu0 0
    %257 = vmatpush1.bf16.msra.mxu0 0
    %258 = vmatprep.subr.bf16.mxu0 0
    %259 = vmatpush1.bf16.msra.mxu0 0
    %260 = vmatprep.subr.bf16.mxu0 0
    %261 = vmatpush1.bf16.msra.mxu0 0
    %262 = vmatprep.subr.bf16.mxu0 0
    %263 = vmatpush1.bf16.msra.mxu0 0
    %264 = vmatprep.subr.bf16.mxu0 0
    %265 = vmatpush1.bf16.msra.mxu0 0
    %266 = vmatprep.subr.bf16.mxu0 0
    %267 = vmatpush1.bf16.msra.mxu0 0
    %268 = vmatprep.subr.bf16.mxu0 0
    %269 = vmatpush1.bf16.msra.mxu0 0
    %270 = vmatprep.subr.bf16.mxu0 0
    %271 = vmatpush1.bf16.msra.mxu0 0
    %272 = vmatprep.subr.bf16.mxu0 0
    %273 = vmatpush1.bf16.msra.mxu0 0
    %274 = vmatprep.subr.bf16.mxu0 0
    %275 = vmatpush1.bf16.msra.mxu0 0
    %276 = vmatprep.mubr.bf16.mxu0 0
    %277 = vmatmul.mubr.bf16.gmra.mrb[0].mxu0 %v201
    %v278 = vpop.f32.mrb[0].mxu0
    %v279 = vadd.f32 %v238, %v278
    %v280 = vpop.f32.mrb[0].mxu0
    %v281 = vpop.f32.mrb[0].mxu0
    %v282 = vadd.f32 %v241, %v281
    %v283 = vpop.f32.mrb[0].mxu0
    %284 = vdwg.mxu0
    %v285 = vmax.f32 %v279, 0.0
    %v286 = vmax.f32 %v282, 0.0
    %v287 = vpack.c.bf16 %v286, %v285
    %v288 = vld [vmem:[%s3] sm:$0x1]
    %s289 = sld [smem:[#allocation2]]
    %v290 = vstv %s289
    %vm291 = vcmask 408576
    %v293 = vsel %vm291, %v288, 0
    %v296 = vsel %vm291, %v287, 0
    %298 = vmatprep.subr.bf16.mxu0 0
    %299 = vmatpush1.bf16.xpose.msra.mxu0 %v296
    %300 = vmatprep.subr.bf16.mxu0 0
    %301 = vmatpush1.bf16.xpose.msra.mxu0 0
    %302 = vmatprep.subr.bf16.mxu0 0
    %303 = vmatpush1.bf16.xpose.msra.mxu0 0
    %304 = vmatprep.subr.bf16.mxu0 0
    %305 = vmatpush1.bf16.xpose.msra.mxu0 0
    %306 = vmatprep.subr.bf16.mxu0 0
    %307 = vmatpush1.bf16.xpose.msra.mxu0 0
    %308 = vmatprep.subr.bf16.mxu0 0
    %309 = vmatpush1.bf16.xpose.msra.mxu0 0
    %310 = vmatprep.subr.bf16.mxu0 0
    %311 = vmatpush1.bf16.xpose.msra.mxu0 0
    %312 = vmatprep.subr.bf16.mxu0 0
    %313 = vmatpush1.bf16.xpose.msra.mxu0 0
    %314 = vmatprep.subr.bf16.mxu0 0
    %315 = vmatpush1.bf16.xpose.msra.mxu0 0
    %316 = vmatprep.subr.bf16.mxu0 0
    %317 = vmatpush1.bf16.xpose.msra.mxu0 0
    %318 = vmatprep.subr.bf16.mxu0 0
    %319 = vmatpush1.bf16.xpose.msra.mxu0 0
    %320 = vmatprep.subr.bf16.mxu0 0
    %321 = vmatpush1.bf16.xpose.msra.mxu0 0
    %322 = vmatprep.subr.bf16.mxu0 0
    %323 = vmatpush1.bf16.xpose.msra.mxu0 0
    %324 = vmatprep.subr.bf16.mxu0 0
    %325 = vmatpush1.bf16.xpose.msra.mxu0 0
    %326 = vmatprep.subr.bf16.mxu0 0
    %327 = vmatpush1.bf16.xpose.msra.mxu0 0
    %328 = vmatprep.subr.bf16.mxu0 0
    %329 = vmatpush1.bf16.xpose.msra.mxu0 0
    %330 = vmatprep.mubr.bf16.mxu0 0
    %331 = vmatmul.mubr.bf16.gmra.mrb[0].mxu0 %v293
    %v332 = vpop.f32.mrb[0].mxu0
    %v333 = vadd.f32 %v290, %v332
    %v334 = vpop.f32.mrb[0].mxu0
    %v335 = vpop.f32.mrb[0].mxu0
    %v336 = vpop.f32.mrb[0].mxu0
    %337 = vdwg.mxu0
    %v338 = vxor.u32 %v333, 2147483648
    %v339 = vmul.f32 %v338, 1.442695
    %v340 = vpow.pop %v339
    %v341 = vadd.f32 %v340, 1.0
    %v342 = vrcp.pop %v341
    %v343 = vmul.f32 1.0, %v342
    %vm344 = vcmask 122880
    %345 = vst.msk [vmem:[#allocation3] sm:$0x1] %vm344, %v343
    // Predicated region
    $region22: #{tpu_custom_call.1} parent=1 // pred_check
      _
    $region23: #{tpu_custom_call.1} parent=1 // pred_check_branch
      %347 = sbr.rel (0) target = $region25
    $region24: #{tpu_custom_call.1} parent=1 // pred_region
      %s349 = ssub.s32 16, 16
      %350 = vsyncadd [#allocation4], %s349
      %s352 = sshll.u32 [#allocation3], 4
      %s353 = int_to_ptr.vmem [resolvable:$true] %s352
      %355 = dma.vmem_to_hbm [thread:$0]  %s353, 16, %s5, [#allocation4]
    $region25: #{tpu_custom_call.1} parent=1 // pred_fallthru
      _
    // Predicated region
    $region26: #{tpu_custom_call.1} parent=1 // pred_check
      _
    $region27: #{tpu_custom_call.1} parent=1 // pred_check_branch
      %357 = sbr.rel (0) target = $region29
    $region28: #{tpu_custom_call.1} parent=1 // pred_region
      %358 = dma.done [#allocation4], 16
    $region29: #{tpu_custom_call.1} parent=1 // pred_fallthru
      _
    %359 = vsyncpa [#allocation4], 1

</llo_original>
